<compile_context>
chip_gen: v7x
topology: tpu7x:2x2x1
jax: 0.10.0
libtpu: 0.0.40
codegen_flags: <defaults>
</compile_context>

<pallas_src>
import jax
import jax.numpy as jnp
from jax.experimental import pallas as pl
from jax.experimental.pallas import tpu as pltpu


def _round_up(x: int, m: int) -> int:
    return (x + m - 1) // m * m


def _linear_relu_kernel_single_k(x_ref, w_ref, b_ref, o_ref):
    """y = relu(x @ W + b) with the whole K dim in one block (common path)."""
    o_ref[...] = jnp.maximum(
        jnp.dot(x_ref[...], w_ref[...], preferred_element_type=jnp.float32)
        + b_ref[...],
        0.0,
    )


def _linear_relu_kernel_multi_k(x_ref, w_ref, b_ref, o_ref):
    """One (row-tile, k-tile) step; o_ref is the VMEM-resident f32 accumulator."""
    k = pl.program_id(1)
    part = jnp.dot(x_ref[...], w_ref[...], preferred_element_type=jnp.float32)

    @pl.when(k == 0)
    def _():
        o_ref[...] = part

    @pl.when(k > 0)
    def _():
        o_ref[...] = o_ref[...] + part

    @pl.when(k == pl.num_programs(1) - 1)
    def _():
        o_ref[...] = jnp.maximum(o_ref[...] + b_ref[...], 0.0)


def hetero_linear_relu(x, w, b2d, *, tile_n=512, max_tile_k=2048):
    """Fused y = relu(x @ w + b).

    x:   (N, K)  node features (cast to bf16 for the MXU / halved HBM reads).
    w:   (K, H)  weight, already transposed to (in_features, out_features).
    b2d: (1, H)  bias row.
    Returns (N, H) float32.
    """
    N, K = x.shape
    K2, H = w.shape
    assert K2 == K and b2d.shape == (1, H)

    if N == 0:  # empty node type: avoid a zero-sized grid.
        return jnp.zeros((0, H), jnp.float32)

    x = x.astype(jnp.bfloat16)
    w = w.astype(jnp.bfloat16)
    b2d = b2d.astype(jnp.float32)

    # Row tile: large for HBM-roofline efficiency, but guarantee >= 2 row
    # tiles when N allows so the "parallel" axis can shard across both v7x
    # TensorCores.
    half_rows = _round_up(max((N + 1) // 2, 1), 8)
    tile_n = max(8, min(_round_up(tile_n, 8), half_rows))

    # K tile: cap so one bf16 weight buffer stays <= ~8 MiB (16 MiB double
    # buffered) even for large H — keeps the kernel inside v7x's 64 MiB VMEM.
    k_by_budget = max(128, ((8 * 1024 * 1024) // (2 * H)) // 128 * 128)
    tile_k_cap = min(_round_up(max_tile_k, 128), k_by_budget)

    if K <= tile_k_cap:
        # Single full-K block (block dim == full array dim is allowed), so x
        # and w need no K padding and there is no reduction loop.
        tile_k, k_tiles = K, 1
        x_in, w_in = x, w
        kernel = _linear_relu_kernel_single_k
    else:
        # Large K: tile the reduction.  The K tail must be zero-padded
        # (partial input blocks on a reduction axis would read garbage).
        tile_k = tile_k_cap
        k_pad = _round_up(K, tile_k)
        k_tiles = k_pad // tile_k
        x_in = jnp.pad(x, ((0, 0), (0, k_pad - K)))
        w_in = jnp.pad(w, ((0, k_pad - K), (0, 0)))
        kernel = _linear_relu_kernel_multi_k

    grid = (pl.cdiv(N, tile_n), k_tiles)

    return pl.pallas_call(
        kernel,
        out_shape=jax.ShapeDtypeStruct((N, H), jnp.float32),
        grid=grid,
        in_specs=[
            pl.BlockSpec((tile_n, tile_k), lambda i, k: (i, k)),  # x tile (bf16)
            pl.BlockSpec((tile_k, H), lambda i, k: (k, 0)),       # weight tile (bf16)
            pl.BlockSpec((1, H), lambda i, k: (0, 0)),            # bias row (f32)
        ],
        # Output block ignores k -> VMEM-resident across the reduction; used
        # directly as the f32 accumulator (no scratch).
        out_specs=pl.BlockSpec((tile_n, H), lambda i, k: (i, 0)),
        compiler_params=pltpu.CompilerParams(
            dimension_semantics=("parallel", "arbitrary"),
            vmem_limit_bytes=48 * 1024 * 1024,
        ),
    )(x_in, w_in, b2d)


def gnn_encoder_forward(x_dict, params, *, tile_n=512):
    """GNNEncoder.forward projection stage: per-node-type Linear(-1, H).relu_().

    params[node_type] = (w, b2d) with w pre-transposed to (in_features, H) and
    pre-cast to bf16, and b2d pre-reshaped to a (1, H) f32 row — done once at
    parameter-load time rather than every forward.
    """
    out_dict = {
        nt: hetero_linear_relu(x, params[nt][0], params[nt][1], tile_n=tile_n)
        for nt, x in x_dict.items()
    }
    # TODO(synk): the HGTConv layers (edge_index_dict gather/scatter message
    # passing with per-destination softmax and per-relation head matrices)
    # have no clean Pallas expression here and are not implemented.
    return out_dict


if __name__ == "__main__":
    key = jax.random.PRNGKey(0)
    hidden_channels = 32
    # Small heterogeneous toy graph: two node types with different raw feature
    # widths (the module's Linear(-1, hidden) is a lazy per-type projection).
    node_specs = {"author": (64, 32), "paper": (40, 48)}  # node_type: (N, in_feats)

    x_dict, params, params_f32 = {}, {}, {}
    for nt, (n, f) in node_specs.items():
        key, kx, kw, kb = jax.random.split(key, 4)
        x_dict[nt] = jax.random.normal(kx, (n, f), dtype=jnp.float32)
        # PyTorch Linear stores weight as (out, in).  Parameter prep done ONCE:
        # transpose to (in, out), cast to bf16 for the MXU, bias -> (1, H) f32.
        w_pt = jax.random.normal(kw, (hidden_channels, f), dtype=jnp.float32) * 0.1
        b = jax.random.normal(kb, (hidden_channels,), dtype=jnp.float32) * 0.1
        params[nt] = (w_pt.T.astype(jnp.bfloat16), b.reshape(1, hidden_channels))
        params_f32[nt] = (w_pt.T, b)

    out_dict = gnn_encoder_forward(x_dict, params)
    for v in out_dict.values():
        jax.block_until_ready(v)

    # Reference check against the original module math in f32.  The kernel
    # uses bf16 operands with f32 accumulation, so the tolerance is loosened
    # accordingly (expected quantization error, not a bug).
    for nt, x in x_dict.items():
        w_t, b = params_f32[nt]
        ref = jnp.maximum(x @ w_t + b, 0.0)
        out = out_dict[nt]
        assert out.shape == (x.shape[0], hidden_channels), nt
        assert out.dtype == jnp.float32, nt
        assert jnp.allclose(out, ref, atol=5e-2, rtol=5e-2), nt

    print("KERNEL_OK")
</pallas_src>

<mosaic_0001>
module attributes {stable_mosaic.version = 11 : i64} {
  func.func @_linear_relu_kernel_single_k(%arg0: i32, %arg1: i32, %arg2: memref<32x32xbf16, #tpu.memory_space<vmem>>, %arg3: memref<32x32xbf16, #tpu.memory_space<vmem>>, %arg4: memref<1x32xf32, #tpu.memory_space<vmem>>, %arg5: memref<32x32xf32, #tpu.memory_space<vmem>>) attributes {dimension_semantics = [#tpu.dimension_semantics<parallel>, #tpu.dimension_semantics<arbitrary>], iteration_bounds = array<i64: 2, 1>, scalar_prefetch = 0 : i64, scratch_operands = 0 : i64, tpu.core_type = #tpu.core_type<tc>, window_params = [{transform_indices = @transform_0, window_bounds = array<i64: 32, 32>}, {transform_indices = @transform_1, window_bounds = array<i64: 32, 32>}, {pipeline_mode = #tpu.pipeline_mode<synchronous>, transform_indices = @transform_2, window_bounds = array<i64: 1, 32>}, {transform_indices = @transform_3, window_bounds = array<i64: 32, 32>}]} {
    %c0 = arith.constant 0 : index
    %c0_0 = arith.constant 0 : index
    %0 = vector.load %arg2[%c0, %c0_0] : memref<32x32xbf16, #tpu.memory_space<vmem>>, vector<32x32xbf16>
    %c0_1 = arith.constant 0 : index
    %c0_2 = arith.constant 0 : index
    %1 = vector.load %arg3[%c0_1, %c0_2] : memref<32x32xbf16, #tpu.memory_space<vmem>>, vector<32x32xbf16>
    %cst = arith.constant dense<0.000000e+00> : vector<32x32xf32>
    %2 = tpu.matmul %0, %1, %cst {dimension_numbers = #tpu.dot_dimension_numbers<[1], [0], [0], [1], [0, 0, 1, 1], [], []>} : vector<32x32xbf16>, vector<32x32xbf16>, vector<32x32xf32> -> vector<32x32xf32>
    %c0_3 = arith.constant 0 : index
    %c0_4 = arith.constant 0 : index
    %3 = vector.load %arg4[%c0_3, %c0_4] : memref<1x32xf32, #tpu.memory_space<vmem>>, vector<1x32xf32>
    %4 = vector.broadcast %3 : vector<1x32xf32> to vector<32x32xf32>
    %5 = arith.addf %2, %4 : vector<32x32xf32>
    %cst_5 = arith.constant 0.000000e+00 : f32
    %6 = vector.broadcast %cst_5 : f32 to vector<32x32xf32>
    %7 = arith.maximumf %5, %6 : vector<32x32xf32>
    %c0_6 = arith.constant 0 : index
    %c0_7 = arith.constant 0 : index
    %8 = vector.load %arg5[%c0_6, %c0_7] : memref<32x32xf32, #tpu.memory_space<vmem>>, vector<32x32xf32>
    tpu.vector_store %arg5[%c0_6, %c0_7], %7 {strides = array<i32>} : memref<32x32xf32, #tpu.memory_space<vmem>>, vector<32x32xf32>,
    return
  }
  func.func @transform_0(%arg0: i32, %arg1: i32) -> (i32, i32) {
    %c0_i32 = arith.constant 0 : i32
    return %arg0, %arg1 : i32, i32
  }
  func.func @transform_1(%arg0: i32, %arg1: i32) -> (i32, i32) {
    %c0_i32 = arith.constant 0 : i32
    %c0_i32_0 = arith.constant 0 : i32
    return %arg1, %c0_i32 : i32, i32
  }
  func.func @transform_2(%arg0: i32, %arg1: i32) -> (i32, i32) {
    %c0_i32 = arith.constant 0 : i32
    %c0_i32_0 = arith.constant 0 : i32
    %c0_i32_1 = arith.constant 0 : i32
    return %c0_i32, %c0_i32_0 : i32, i32
  }
  func.func @transform_3(%arg0: i32, %arg1: i32) -> (i32, i32) {
    %c0_i32 = arith.constant 0 : i32
    %c0_i32_0 = arith.constant 0 : i32
    return %arg0, %c0_i32 : i32, i32
  }
}

</mosaic_0001>

<llo_original>
// kernel: tpu_custom_call.1
$region0: #{tpu_custom_call.1}
  #allocation0 [shape = 'u32[]', space=smem, size = 0x4, offset = 0x4, fixed_abs, tag = 'smem constant byte address 0x4 - core index']
  #allocation1 [shape = 'u32[144,128]{1,0:T(1,128)}', space=vmem, size = 0x12000, scoped, tag = 'internal scratch']
  %s0 = inlined_call_operand.vmem [shape: bf16[64,32], index: 0, kind: input, shape index: {}]
  %s1 = inlined_call_operand.vmem [shape: bf16[32,32], index: 1, kind: input, shape index: {}]
  %s2 = inlined_call_operand.vmem [shape: f32[1,32], index: 2, kind: input, shape index: {}]
  %s3 = inlined_call_operand.vmem [shape: f32[64,32], index: 3, kind: output, shape index: {}]
  %s4 = sld [smem:[#allocation0]]
  $region45: #{tpu_custom_call.1} parent=0
    _
  %s6 = ssub.s32 1, %s4
  %s7 = scalar_select 0, %s6, %s4
  loop: start=0, step=1, limit=4
  $region2: #{tpu_custom_call.1} parent=0 // loop_pre_header
    _
  $region3: #{tpu_custom_call.1} parent=0 // loop_header
    %s9 = sphi 0, %s13
    %p10 = scmp.ge.s32.totalorder %s9, 4
    %s16 = sphi 0, %s28
    %s17 = sphi 0, %s24
    %s18 = sphi 0, %s16
    %s19 = sphi 0, %s17
    %s20 = sphi 0, %s18
    %s21 = sphi 0, %s19
    %s33 = sphi 0, %s35
    %s36 = sphi 0, %s33
    %s37 = sphi 0, %s36
    %s53 = sphi 0, %s37
    %s59 = sphi 0, %s61
    %s62 = sphi 0, %s59
    %s63 = sphi 0, %s62
    %s79 = sphi 0, %s63
    %s83 = sphi 0, %s83
    %s85 = sphi 0, %s83
    %s86 = sphi 0, %s85
    %s100 = sphi 0, %s86
    %s106 = sphi 0, %s108
    %s109 = sphi 0, %s106
    %s110 = sphi 0, %s109
    %s126 = sphi 0, %s110
  $region4: #{tpu_custom_call.1} parent=0 // loop_header_branch
    %12 = sbr.rel (%p10) target = $region8
  $region5: #{tpu_custom_call.1} parent=0 // loop_body
    %s14 = ssub.s32 %s9, 1
    %s15 = ssub.s32 %s9, 2
    %s22 = sadd.s32 1, %s17
    %p23 = scmp.ge.s32.totalorder %s22, 1
    %s24 = scalar_select %p23, 0, %s22
    %s25 = sadd.s32 1, %s16
    %s26 = scalar_select %p23, %s25, %s16
    %p27 = scmp.ge.s32.totalorder %s26, 2
    %s28 = scalar_select %p27, 0, %s26
    %s29 = ssub.s32 %s16, %s28
    %s30 = ssub.s32 %s17, %s24
    %s31 = sor.u32 %s29, %s30
    %p32 = scmp.eq.s32.totalorder %s31, 0
    %s34 = sadd.s32 %s33, 1
    %s35 = scalar_select %p32, %s33, %s34
    %p38 = pneg %p32
    %p39 = scmp.eq.s32.totalorder %s9, 1
    %p40 = por %p38, %p39
    %p41 = scmp.ne.s32.totalorder %s33, %s36
    %p42 = scmp.eq.s32.totalorder %s9, 0
    %p43 = por %p41, %p42
    %p44 = scmp.ne.s32.totalorder %s33, %s36
    %p45 = scmp.eq.s32.totalorder %s14, 1
    %p46 = por %p44, %p45
    %p47 = scmp.ne.s32.totalorder %s36, %s37
    %p48 = scmp.eq.s32.totalorder %s14, 0
    %p49 = por %p47, %p48
    %p50 = scmp.ne.s32.totalorder %s36, %s37
    %p51 = scmp.eq.s32.totalorder %s15, 1
    %p52 = por %p50, %p51
    %p54 = scmp.ne.s32.totalorder %s37, %s53
    %p55 = scmp.eq.s32.totalorder %s15, 0
    %p56 = por %p54, %p55
    %s57 = ssub.s32 %s17, %s24
    %p58 = scmp.eq.s32.totalorder %s57, 0
    %s60 = sadd.s32 %s59, 1
    %s61 = scalar_select %p58, %s59, %s60
    %p64 = pneg %p58
    %p65 = scmp.eq.s32.totalorder %s9, 1
    %p66 = por %p64, %p65
    %p67 = scmp.ne.s32.totalorder %s59, %s62
    %p68 = scmp.eq.s32.totalorder %s9, 0
    %p69 = por %p67, %p68
    %p70 = scmp.ne.s32.totalorder %s59, %s62
    %p71 = scmp.eq.s32.totalorder %s14, 1
    %p72 = por %p70, %p71
    %p73 = scmp.ne.s32.totalorder %s62, %s63
    %p74 = scmp.eq.s32.totalorder %s14, 0
    %p75 = por %p73, %p74
    %p76 = scmp.ne.s32.totalorder %s62, %s63
    %p77 = scmp.eq.s32.totalorder %s15, 1
    %p78 = por %p76, %p77
    %p80 = scmp.ne.s32.totalorder %s63, %s79
    %p81 = scmp.eq.s32.totalorder %s15, 0
    %p82 = por %p80, %p81
    %s84 = sadd.s32 %s83, 1
    %p87 = scmp.eq.s32.totalorder %s9, 1
    %p88 = scmp.ne.s32.totalorder %s83, %s85
    %p89 = scmp.eq.s32.totalorder %s9, 0
    %p90 = por %p88, %p89
    %p91 = scmp.ne.s32.totalorder %s83, %s85
    %p92 = scmp.eq.s32.totalorder %s14, 1
    %p93 = por %p91, %p92
    %p94 = scmp.ne.s32.totalorder %s85, %s86
    %p95 = scmp.eq.s32.totalorder %s14, 0
    %p96 = por %p94, %p95
    %p97 = scmp.ne.s32.totalorder %s85, %s86
    %p98 = scmp.eq.s32.totalorder %s15, 1
    %p99 = por %p97, %p98
    %p101 = scmp.ne.s32.totalorder %s86, %s100
    %p102 = scmp.eq.s32.totalorder %s15, 0
    %p103 = por %p101, %p102
    %s104 = ssub.s32 %s16, %s28
    %p105 = scmp.eq.s32.totalorder %s104, 0
    %s107 = sadd.s32 %s106, 1
    %s108 = scalar_select %p105, %s106, %s107
    %p111 = pneg %p105
    %p112 = scmp.eq.s32.totalorder %s9, 1
    %p113 = por %p111, %p112
    %p114 = scmp.ne.s32.totalorder %s106, %s109
    %p115 = scmp.eq.s32.totalorder %s9, 0
    %p116 = por %p114, %p115
    %p117 = scmp.ne.s32.totalorder %s106, %s109
    %p118 = scmp.eq.s32.totalorder %s14, 1
    %p119 = por %p117, %p118
    %p120 = scmp.ne.s32.totalorder %s109, %s110
    %p121 = scmp.eq.s32.totalorder %s14, 0
    %p122 = por %p120, %p121
    %p123 = scmp.ne.s32.totalorder %s109, %s110
    %p124 = scmp.eq.s32.totalorder %s15, 1
    %p125 = por %p123, %p124
    %p127 = scmp.ne.s32.totalorder %s110, %s126
    %p128 = scmp.eq.s32.totalorder %s15, 0
    %p129 = por %p127, %p128
    %p130 = scmp.le.s32.totalorder 1, %s9
    %p131 = scmp.lt.s32.totalorder %s9, 3
    %p132 = pnand %p130, %p131
    %p133 = pneg %p132
    // Predicated region
    $region9: #{tpu_custom_call.1} parent=5 // pred_check
      _
    $region10: #{tpu_custom_call.1} parent=5 // pred_check_branch
      %135 = sbr.rel (%p132) target = $region12
    $region11: #{tpu_custom_call.1} parent=5 // pred_region
      %s136 = ssub.s32 %s9, 1
      // Predicated region
      $region13: #{tpu_custom_call.1} parent=11 // pred_check
        %p137 = pneg %p75
      $region14: #{tpu_custom_call.1} parent=11 // pred_check_branch
        %139 = sbr.rel (%p137) target = $region16
      $region15: #{tpu_custom_call.1} parent=11 // pred_region
        %s140 = smul.u32 4, %s19
        %p141 = scmp.lt.s32.totalorder %s140, 3
        %s142 = scalar_select %p141, %s140, 3
        %s143 = smul.addr %s142, 4
        %s144 = scalar_lea.vmem %s1, %s143
        %s145 = smul.u32 4, %s19
      $region16: #{tpu_custom_call.1} parent=11 // pred_fallthru
        _
      // Predicated region
      $region17: #{tpu_custom_call.1} parent=11 // pred_check
        %p146 = pneg %p96
      $region18: #{tpu_custom_call.1} parent=11 // pred_check_branch
        %148 = sbr.rel (%p146) target = $region20
      $region19: #{tpu_custom_call.1} parent=11 // pred_region
        _
      $region20: #{tpu_custom_call.1} parent=11 // pred_fallthru
        _
    $region12: #{tpu_custom_call.1} parent=5 // pred_fallthru
      _
    %p149 = scmp.lt.s32.totalorder %s9, 2
    // Predicated region
    $region21: #{tpu_custom_call.1} parent=5 // pred_check
      %p150 = pneg %p149
    $region22: #{tpu_custom_call.1} parent=5 // pred_check_branch
      %152 = sbr.rel (%p150) target = $region24
    $region23: #{tpu_custom_call.1} parent=5 // pred_region
      // Predicated region
      $region25: #{tpu_custom_call.1} parent=23 // pred_check
        %p153 = pneg %p43
      $region26: #{tpu_custom_call.1} parent=23 // pred_check_branch
        %155 = sbr.rel (%p153) target = $region28
      $region27: #{tpu_custom_call.1} parent=23 // pred_region
        %s156 = smul.u32 4, %s16
        %p157 = scmp.lt.s32.totalorder %s156, 7
        %s158 = scalar_select %p157, %s156, 7
        %p159 = scmp.lt.s32.totalorder %s17, 0
        %s160 = scalar_select %p159, %s17, 0
        %s161 = sadd.s32 %s160, %s158
        %s162 = smul.addr %s161, 4
        %s163 = scalar_lea.vmem %s0, %s162
        %s164 = smul.u32 4, %s16
      $region28: #{tpu_custom_call.1} parent=23 // pred_fallthru
        _
    $region24: #{tpu_custom_call.1} parent=5 // pred_fallthru
      _
    %p165 = scmp.le.s32.totalorder 1, %s9
    %p166 = scmp.lt.s32.totalorder %s9, 3
    %p167 = pnand %p165, %p166
    %p168 = pneg %p167
    // Predicated region
    $region29: #{tpu_custom_call.1} parent=5 // pred_check
      _
    $region30: #{tpu_custom_call.1} parent=5 // pred_check_branch
      %170 = sbr.rel (%p167) target = $region32
    $region31: #{tpu_custom_call.1} parent=5 // pred_region
      %s171 = ssub.s32 %s9, 1
      %s172 = smul.u32 4, %s18
      %p173 = scmp.lt.s32.totalorder %s172, 7
      %s174 = scalar_select %p173, %s172, 7
      %p175 = scmp.lt.s32.totalorder %s19, 0
      %s176 = scalar_select %p175, %s19, 0
      %s177 = sadd.s32 %s176, %s174
      %s178 = smul.addr %s177, 4
      %s179 = scalar_lea.vmem %s0, %s178
      %p180 = pneg %p49
      %p181 = pneg %p46
      %s182 = smul.u32 4, %s19
      %p183 = scmp.lt.s32.totalorder %s182, 3
      %s184 = scalar_select %p183, %s182, 3
      %s185 = smul.addr %s184, 4
      %s186 = scalar_lea.vmem %s1, %s185
      %p187 = pneg %p75
      %p188 = pneg %p72
      %p189 = pneg %p96
      %p190 = pneg %p93
      %p191 = pneg %p122
      %p192 = pneg %p119
      %s193 = smul.u32 4, %s18
      %p194 = scmp.lt.s32.totalorder %s193, 7
      %s195 = scalar_select %p194, %s193, 7
      %s196 = smul.addr %s195, 8
      %s197 = scalar_lea.vmem %s3, %s196
      %s198 = smul.u32 4, %s18
      %p199 = scmp.lt.s32.totalorder %s198, 7
      %s200 = scalar_select %p199, %s198, 7
      %p201 = scmp.lt.s32.totalorder %s19, 0
      %s202 = scalar_select %p201, %s19, 0
      %s203 = sadd.s32 %s202, %s200
      %s204 = smul.addr %s203, 4
      %s205 = scalar_lea.vmem %s0, %s204
      %s206 = smul.u32 4, %s18
      %s207 = smul.u32 4, %s19
      %p208 = scmp.lt.s32.totalorder %s207, 3
      %s209 = scalar_select %p208, %s207, 3
      %s210 = smul.addr %s209, 4
      %s211 = scalar_lea.vmem %s1, %s210
      %s212 = smul.u32 4, %s19
      %s213 = smul.u32 4, %s18
      %p214 = scmp.lt.s32.totalorder %s213, 7
      %s215 = scalar_select %p214, %s213, 7
      %s216 = smul.addr %s215, 8
      %s217 = scalar_lea.vmem %s3, %s216
      %s218 = smul.u32 4, %s18
      %v220 = vld [vmem:[%s205] sm:$0xf]
      %v221 = vld [vmem:[%s205 + $0x4] sm:$0xf]
      %v222 = vld [vmem:[%s205 + $0x8] sm:$0xf]
      %v223 = vld [vmem:[%s205 + $0xc] sm:$0xf]
      %v224 = vld [vmem:[%s211] sm:$0xf]
      %v225 = vld [vmem:[%s211 + $0x4] sm:$0xf]
      %v226 = vld [vmem:[%s211 + $0x8] sm:$0xf]
      %v227 = vld [vmem:[%s211 + $0xc] sm:$0xf]
      %v228 = vld [vmem:[%s2] sm:$0x1]
      %v230 = vlaneseq
      %v231 = vshrl.u32 %v230, 7
      %v232 = vsub.s32 0, %v231
      %v233 = vrot.slane %v228, %v232
      %v239 = vunpack.c.l.b16 %v220
      %v240 = vunpack.c.l.b16 %v221
      %v241 = vunpack.c.l.b16 %v222
      %v242 = vunpack.c.l.b16 %v223
      %v243 = vpack.c.b16 %v240, %v239
      %v244 = vpack.c.b16 %v242, %v241
      %v249 = vunpack.c.l.b16 %v224
      %v250 = vunpack.c.l.b16 %v225
      %v251 = vunpack.c.l.b16 %v226
      %v252 = vunpack.c.l.b16 %v227
      %v253 = vpack.c.b16 %v250, %v249
      %v254 = vpack.c.b16 %v252, %v251
      %vm257 = vcmask 261120
      %v259 = vsel %vm257, %v243, 0
      %v262 = vsel %vm257, %v244, 0
      %264 = vmatprep.subr.bf16.mxu0 0
      %265 = vmatpush1.bf16.msra.mxu0 %v253
      %266 = vmatprep.subr.bf16.mxu0 0
      %267 = vmatpush1.bf16.msra.mxu0 %v254
      %268 = vmatprep.subr.bf16.mxu0 0
      %269 = vmatpush1.bf16.msra.mxu0 0
      %270 = vmatprep.subr.bf16.mxu0 0
      %271 = vmatpush1.bf16.msra.mxu0 0
      %272 = vmatprep.subr.bf16.mxu0 0
      %273 = vmatpush1.bf16.msra.mxu0 0
      %274 = vmatprep.subr.bf16.mxu0 0
      %275 = vmatpush1.bf16.msra.mxu0 0
      %276 = vmatprep.subr.bf16.mxu0 0
      %277 = vmatpush1.bf16.msra.mxu0 0
      %278 = vmatprep.subr.bf16.mxu0 0
      %279 = vmatpush1.bf16.msra.mxu0 0
      %280 = vmatprep.subr.bf16.mxu0 0
      %281 = vmatpush1.bf16.msra.mxu0 0
      %282 = vmatprep.subr.bf16.mxu0 0
      %283 = vmatpush1.bf16.msra.mxu0 0
      %284 = vmatprep.subr.bf16.mxu0 0
      %285 = vmatpush1.bf16.msra.mxu0 0
      %286 = vmatprep.subr.bf16.mxu0 0
      %287 = vmatpush1.bf16.msra.mxu0 0
      %288 = vmatprep.subr.bf16.mxu0 0
      %289 = vmatpush1.bf16.msra.mxu0 0
      %290 = vmatprep.subr.bf16.mxu0 0
      %291 = vmatpush1.bf16.msra.mxu0 0
      %292 = vmatprep.subr.bf16.mxu0 0
      %293 = vmatpush1.bf16.msra.mxu0 0
      %294 = vmatprep.subr.bf16.mxu0 0
      %295 = vmatpush1.bf16.msra.mxu0 0
      %296 = vmatprep.mubr.bf16.mxu0 0
      %297 = vmatmul.mubr.bf16.gmra.mrb[0].mxu0 %v259
      %v298 = vpop.f32.mrb[0].mxu0
      %v299 = vadd.f32 %v233, %v298
      %v300 = vpop.f32.mrb[0].mxu0
      %v301 = vpop.f32.mrb[0].mxu0
      %v302 = vadd.f32 %v233, %v301
      %v303 = vpop.f32.mrb[0].mxu0
      %304 = vmatprep.mubr.bf16.mxu0 0
      %305 = vmatmul.mubr.bf16.gmra.mrb[0].mxu0 %v262
      %v306 = vpop.f32.mrb[0].mxu0
      %v307 = vadd.f32 %v233, %v306
      %v308 = vpop.f32.mrb[0].mxu0
      %v309 = vpop.f32.mrb[0].mxu0
      %v310 = vadd.f32 %v233, %v309
      %v311 = vpop.f32.mrb[0].mxu0
      %312 = vdwg.mxu0
      %v313 = vmax.f32 %v299, 0.0
      %v314 = vmax.f32 %v302, 0.0
      %v315 = vmax.f32 %v307, 0.0
      %v316 = vmax.f32 %v310, 0.0
      %317 = vst.msk [vmem:[%s217] sm:$0xff] %vm257, %v313
      %318 = vst.msk [vmem:[%s217 + $0x8] sm:$0xff] %vm257, %v314
      %319 = vst.msk [vmem:[%s217 + $0x10] sm:$0xff] %vm257, %v315
      %320 = vst.msk [vmem:[%s217 + $0x18] sm:$0xff] %vm257, %v316
      %s321 = smul.u32 4, %s18
      %p322 = scmp.lt.s32.totalorder %s321, 7
      %s323 = scalar_select %p322, %s321, 7
      %s324 = smul.addr %s323, 8
      %s325 = scalar_lea.vmem %s3, %s324
      // Predicated region
      $region33: #{tpu_custom_call.1} parent=31 // pred_check
        %p326 = pneg %p119
      $region34: #{tpu_custom_call.1} parent=31 // pred_check_branch
        %328 = sbr.rel (%p326) target = $region36
      $region35: #{tpu_custom_call.1} parent=31 // pred_region
        %s329 = smul.u32 4, %s18
      $region36: #{tpu_custom_call.1} parent=31 // pred_fallthru
        _
    $region32: #{tpu_custom_call.1} parent=5 // pred_fallthru
      _
    %p330 = scmp.le.s32.totalorder 2, %s9
    // Predicated region
    $region37: #{tpu_custom_call.1} parent=5 // pred_check
      %p331 = pneg %p330
    $region38: #{tpu_custom_call.1} parent=5 // pred_check_branch
      %333 = sbr.rel (%p331) target = $region40
    $region39: #{tpu_custom_call.1} parent=5 // pred_region
      %s334 = ssub.s32 %s9, 2
      // Predicated region
      $region41: #{tpu_custom_call.1} parent=39 // pred_check
        %p335 = pneg %p125
      $region42: #{tpu_custom_call.1} parent=39 // pred_check_branch
        %337 = sbr.rel (%p335) target = $region44
      $region43: #{tpu_custom_call.1} parent=39 // pred_region
        %s338 = smul.u32 4, %s20
        %p339 = scmp.lt.s32.totalorder %s338, 7
        %s340 = scalar_select %p339, %s338, 7
        %s341 = smul.addr %s340, 8
        %s342 = scalar_lea.vmem %s3, %s341
      $region44: #{tpu_custom_call.1} parent=39 // pred_fallthru
        _
    $region40: #{tpu_custom_call.1} parent=5 // pred_fallthru
      _
  $region6: #{tpu_custom_call.1} parent=0 // loop_footer
    %s13 = sadd.s32 1, %s9
  $region7: #{tpu_custom_call.1} parent=0 // loop_footer_branch
    %8 = sbr.rel target = $region3
  $region8: #{tpu_custom_call.1} parent=0 // loop_exit
    _

</llo_original>
